<compile_context>
chip_gen: v7x
topology: tpu7x:2x2x1
jax: 0.10.0
libtpu: 0.0.40
codegen_flags: <defaults>
</compile_context>

<pallas_src>
import functools

import jax
import jax.numpy as jnp
from jax.experimental import pallas as pl
from jax.experimental.pallas import tpu as pltpu

BN_EPS = 1e-5
LANE = 128


def _bn_relu(h, gamma, beta):
    # Training-mode BatchNorm1d (biased variance), two-pass centered form for
    # numerical parity with PyTorch, affine folded into a [1,hidden] scale row.
    inv_b = 1.0 / h.shape[0]
    mean = jnp.sum(h, axis=0, keepdims=True) * inv_b
    centered = h - mean
    var = jnp.sum(centered * centered, axis=0, keepdims=True) * inv_b
    scale = gamma * jax.lax.rsqrt(var + BN_EPS)          # rsqrt -> EUP slot
    return jnp.maximum(centered * scale + beta, 0.0)


def projector_kernel(
    x_ref,      # [B, input_dim]
    w1_ref,     # [input_dim, hidden]
    w2_ref,     # [hidden, hidden]
    wmv_ref,    # [hidden, 2*output]            (wmu | wvar)
    rows_ref,   # [4, hidden]                   (g1, be1, g2, be2)
    bmv_ref,    # [1, 2*output]                 (bmu | bvar)
    eps_ref,    # [B, output]
    out_ref,    # [B, out_pad]                  (mu | logVar | rp | zero pad)
    *,
    output_dim,
):
    x = x_ref[...]

    rows = rows_ref[...]
    g1, be1, g2, be2 = rows[0:1], rows[1:2], rows[2:3], rows[3:4]

    # interpreter[0..2]: Linear -> BatchNorm1d -> ReLU
    # (linear bias omitted: it cancels exactly under training-mode BN)
    h = jnp.dot(x, w1_ref[...], preferred_element_type=jnp.float32)
    h = _bn_relu(h, g1, be1)

    # interpreter[3..5]: Linear -> BatchNorm1d -> ReLU
    h = jnp.dot(h, w2_ref[...], preferred_element_type=jnp.float32)
    h = _bn_relu(h, g2, be2)

    # fc_mu | fc_var fused into one MXU matmul; y is already the lane-dense
    # mu|logvar block, so it is stored as-is.
    y = jnp.dot(h, wmv_ref[...], preferred_element_type=jnp.float32) + bmv_ref[...]
    mu = y[:, :output_dim]
    logvar = y[:, output_dim:]

    # reparameterize: rsample = mu + exp(logVar / 2) * eps,  eps ~ N(0, 1)
    rp = mu + jnp.exp(logvar * 0.5) * eps_ref[...]

    out = jnp.concatenate([y, rp], axis=-1)
    pad = out_ref.shape[1] - out.shape[1]
    if pad:  # lane-dense (multiple-of-128) store -> unmasked full vst
        out = jnp.concatenate(
            [out, jnp.zeros((out.shape[0], pad), out.dtype)], axis=-1
        )
    out_ref[...] = out.astype(out_ref.dtype)


def pack_params(params):
    """One-time host-side packing (call once, reuse across forward calls)."""
    return dict(
        w1=params["w1"],
        w2=params["w2"],
        wmv=jnp.concatenate([params["wmu"], params["wvar"]], axis=1),
        rows=jnp.concatenate(
            [params["g1"], params["be1"], params["g2"], params["be2"]], axis=0
        ),
        bmv=jnp.concatenate([params["bmu"], params["bvar"]], axis=1),
        # b1 / b2 intentionally dropped: bias before training-mode BN cancels.
    )


@jax.jit
def projector_forward(x, packed, eps):
    B = x.shape[0]
    output_dim = eps.shape[1]
    out_pad = pl.cdiv(3 * output_dim, LANE) * LANE  # lane-dense output slab

    kernel = functools.partial(projector_kernel, output_dim=output_dim)
    vmem = lambda: pl.BlockSpec(memory_space=pltpu.MemorySpace.VMEM)

    out = pl.pallas_call(
        kernel,
        out_shape=jax.ShapeDtypeStruct((B, out_pad), jnp.float32),
        in_specs=[vmem() for _ in range(7)],
        out_specs=vmem(),
    )(x, packed["w1"], packed["w2"], packed["wmv"], packed["rows"],
      packed["bmv"], eps)

    mu = out[:, :output_dim]
    logvar = out[:, output_dim:2 * output_dim]
    rp = out[:, 2 * output_dim:3 * output_dim]
    return rp, mu, logvar


def init_params(key, input_dim, hidden_dim, output_dim):
    """Deterministic synthetic parameters (uniform init similar to nn.Linear)."""
    keys = jax.random.split(key, 8)

    def linear(kw, kb, fan_in, fan_out):
        bound = 1.0 / jnp.sqrt(fan_in)
        # stored pre-transposed: [in, out]
        w = jax.random.uniform(kw, (fan_in, fan_out), jnp.float32, -bound, bound)
        b = jax.random.uniform(kb, (1, fan_out), jnp.float32, -bound, bound)
        return w, b

    w1, b1 = linear(keys[0], keys[1], input_dim, hidden_dim)
    w2, b2 = linear(keys[2], keys[3], hidden_dim, hidden_dim)
    wmu, bmu = linear(keys[4], keys[5], hidden_dim, output_dim)
    wvar, bvar = linear(keys[6], keys[7], hidden_dim, output_dim)

    return dict(
        w1=w1, b1=b1,
        g1=jnp.ones((1, hidden_dim), jnp.float32),
        be1=jnp.zeros((1, hidden_dim), jnp.float32),
        w2=w2, b2=b2,
        g2=jnp.ones((1, hidden_dim), jnp.float32),
        be2=jnp.zeros((1, hidden_dim), jnp.float32),
        wmu=wmu, bmu=bmu,
        wvar=wvar, bvar=bvar,
    )


def reference_forward(x, params, eps):
    """Pure-JAX reference of the full module math (with biases, two-pass BN)."""
    def bn_relu(h, g, b):
        m = jnp.mean(h, axis=0, keepdims=True)
        v = jnp.mean((h - m) ** 2, axis=0, keepdims=True)
        return jnp.maximum((h - m) / jnp.sqrt(v + BN_EPS) * g + b, 0.0)

    h = bn_relu(x @ params["w1"] + params["b1"], params["g1"], params["be1"])
    h = bn_relu(h @ params["w2"] + params["b2"], params["g2"], params["be2"])
    mu = h @ params["wmu"] + params["bmu"]
    logvar = h @ params["wvar"] + params["bvar"]
    rp = mu + jnp.exp(logvar / 2) * eps
    return rp, mu, logvar


if __name__ == "__main__":
    B, INPUT_DIM, HIDDEN_DIM, OUTPUT_DIM = 8, 32, 32, 16

    key = jax.random.PRNGKey(0)
    kx, keps, kparams = jax.random.split(key, 3)

    x = jax.random.normal(kx, (B, INPUT_DIM), jnp.float32)
    # TODO(synk): PyTorch's tdist.Normal.rsample() draws from torch's RNG;
    # here eps is drawn deterministically from a JAX PRNG instead.
    eps = jax.random.normal(keps, (B, OUTPUT_DIM), jnp.float32)
    params = init_params(kparams, INPUT_DIM, HIDDEN_DIM, OUTPUT_DIM)

    packed = pack_params(params)          # one-time packing, reused per call
    rp, mu, logvar = projector_forward(x, packed, eps)
    jax.block_until_ready((rp, mu, logvar))

    rp_ref, mu_ref, logvar_ref = reference_forward(x, params, eps)
    assert jnp.allclose(rp, rp_ref, atol=1e-4, rtol=1e-4)
    assert jnp.allclose(mu, mu_ref, atol=1e-4, rtol=1e-4)
    assert jnp.allclose(logvar, logvar_ref, atol=1e-4, rtol=1e-4)

    print("KERNEL_OK")
</pallas_src>

<mosaic_0001>
module attributes {stable_mosaic.version = 11 : i64} {
  func.func @projector_kernel(%arg0: memref<8x32xf32, #tpu.memory_space<vmem>>, %arg1: memref<32x32xf32, #tpu.memory_space<vmem>>, %arg2: memref<32x32xf32, #tpu.memory_space<vmem>>, %arg3: memref<32x32xf32, #tpu.memory_space<vmem>>, %arg4: memref<4x32xf32, #tpu.memory_space<vmem>>, %arg5: memref<1x32xf32, #tpu.memory_space<vmem>>, %arg6: memref<8x16xf32, #tpu.memory_space<vmem>>, %arg7: memref<8x128xf32, #tpu.memory_space<vmem>>) attributes {dimension_semantics = [], scalar_prefetch = 0 : i64, scratch_operands = 0 : i64, tpu.core_type = #tpu.core_type<tc>} {
    %c0 = arith.constant 0 : index
    %c0_0 = arith.constant 0 : index
    %0 = vector.load %arg0[%c0, %c0_0] : memref<8x32xf32, #tpu.memory_space<vmem>>, vector<8x32xf32>
    %c0_1 = arith.constant 0 : index
    %c0_2 = arith.constant 0 : index
    %1 = vector.load %arg4[%c0_1, %c0_2] : memref<4x32xf32, #tpu.memory_space<vmem>>, vector<4x32xf32>
    %2 = vector.extract_strided_slice %1 {offsets = [0, 0], sizes = [1, 32], strides = [1, 1]} : vector<4x32xf32> to vector<1x32xf32>
    %3 = vector.extract_strided_slice %1 {offsets = [1, 0], sizes = [1, 32], strides = [1, 1]} : vector<4x32xf32> to vector<1x32xf32>
    %4 = vector.extract_strided_slice %1 {offsets = [2, 0], sizes = [1, 32], strides = [1, 1]} : vector<4x32xf32> to vector<1x32xf32>
    %5 = vector.extract_strided_slice %1 {offsets = [3, 0], sizes = [1, 32], strides = [1, 1]} : vector<4x32xf32> to vector<1x32xf32>
    %c0_3 = arith.constant 0 : index
    %c0_4 = arith.constant 0 : index
    %6 = vector.load %arg1[%c0_3, %c0_4] : memref<32x32xf32, #tpu.memory_space<vmem>>, vector<32x32xf32>
    %cst = arith.constant dense<0.000000e+00> : vector<8x32xf32>
    %7 = tpu.matmul %0, %6, %cst {dimension_numbers = #tpu.dot_dimension_numbers<[1], [0], [0], [1], [0, 0, 1, 1], [], []>} : vector<8x32xf32>, vector<32x32xf32>, vector<8x32xf32> -> vector<8x32xf32>
    %cst_5 = arith.constant dense<0.000000e+00> : vector<32xf32>
    %8 = vector.multi_reduction <add>, %7, %cst_5 [0] : vector<8x32xf32> to vector<32xf32>
    %9 = vector.shape_cast %8 : vector<32xf32> to vector<1x32xf32>
    %cst_6 = arith.constant 1.250000e-01 : f32
    %10 = vector.broadcast %cst_6 : f32 to vector<1x32xf32>
    %11 = arith.mulf %9, %10 : vector<1x32xf32>
    %12 = vector.broadcast %11 : vector<1x32xf32> to vector<8x32xf32>
    %13 = arith.subf %7, %12 : vector<8x32xf32>
    %14 = arith.mulf %13, %13 : vector<8x32xf32>
    %cst_7 = arith.constant dense<0.000000e+00> : vector<32xf32>
    %15 = vector.multi_reduction <add>, %14, %cst_7 [0] : vector<8x32xf32> to vector<32xf32>
    %16 = vector.shape_cast %15 : vector<32xf32> to vector<1x32xf32>
    %cst_8 = arith.constant 1.250000e-01 : f32
    %17 = vector.broadcast %cst_8 : f32 to vector<1x32xf32>
    %18 = arith.mulf %16, %17 : vector<1x32xf32>
    %cst_9 = arith.constant 9.99999974E-6 : f32
    %19 = vector.broadcast %cst_9 : f32 to vector<1x32xf32>
    %20 = arith.addf %18, %19 : vector<1x32xf32>
    %21 = math.rsqrt %20 : vector<1x32xf32>
    %22 = arith.mulf %2, %21 : vector<1x32xf32>
    %23 = vector.broadcast %22 : vector<1x32xf32> to vector<8x32xf32>
    %24 = arith.mulf %13, %23 : vector<8x32xf32>
    %25 = vector.broadcast %3 : vector<1x32xf32> to vector<8x32xf32>
    %26 = arith.addf %24, %25 : vector<8x32xf32>
    %cst_10 = arith.constant 0.000000e+00 : f32
    %27 = vector.broadcast %cst_10 : f32 to vector<8x32xf32>
    %28 = arith.maximumf %26, %27 : vector<8x32xf32>
    %c0_11 = arith.constant 0 : index
    %c0_12 = arith.constant 0 : index
    %29 = vector.load %arg2[%c0_11, %c0_12] : memref<32x32xf32, #tpu.memory_space<vmem>>, vector<32x32xf32>
    %cst_13 = arith.constant dense<0.000000e+00> : vector<8x32xf32>
    %30 = tpu.matmul %28, %29, %cst_13 {dimension_numbers = #tpu.dot_dimension_numbers<[1], [0], [0], [1], [0, 0, 1, 1], [], []>} : vector<8x32xf32>, vector<32x32xf32>, vector<8x32xf32> -> vector<8x32xf32>
    %cst_14 = arith.constant dense<0.000000e+00> : vector<32xf32>
    %31 = vector.multi_reduction <add>, %30, %cst_14 [0] : vector<8x32xf32> to vector<32xf32>
    %32 = vector.shape_cast %31 : vector<32xf32> to vector<1x32xf32>
    %cst_15 = arith.constant 1.250000e-01 : f32
    %33 = vector.broadcast %cst_15 : f32 to vector<1x32xf32>
    %34 = arith.mulf %32, %33 : vector<1x32xf32>
    %35 = vector.broadcast %34 : vector<1x32xf32> to vector<8x32xf32>
    %36 = arith.subf %30, %35 : vector<8x32xf32>
    %37 = arith.mulf %36, %36 : vector<8x32xf32>
    %cst_16 = arith.constant dense<0.000000e+00> : vector<32xf32>
    %38 = vector.multi_reduction <add>, %37, %cst_16 [0] : vector<8x32xf32> to vector<32xf32>
    %39 = vector.shape_cast %38 : vector<32xf32> to vector<1x32xf32>
    %cst_17 = arith.constant 1.250000e-01 : f32
    %40 = vector.broadcast %cst_17 : f32 to vector<1x32xf32>
    %41 = arith.mulf %39, %40 : vector<1x32xf32>
    %cst_18 = arith.constant 9.99999974E-6 : f32
    %42 = vector.broadcast %cst_18 : f32 to vector<1x32xf32>
    %43 = arith.addf %41, %42 : vector<1x32xf32>
    %44 = math.rsqrt %43 : vector<1x32xf32>
    %45 = arith.mulf %4, %44 : vector<1x32xf32>
    %46 = vector.broadcast %45 : vector<1x32xf32> to vector<8x32xf32>
    %47 = arith.mulf %36, %46 : vector<8x32xf32>
    %48 = vector.broadcast %5 : vector<1x32xf32> to vector<8x32xf32>
    %49 = arith.addf %47, %48 : vector<8x32xf32>
    %cst_19 = arith.constant 0.000000e+00 : f32
    %50 = vector.broadcast %cst_19 : f32 to vector<8x32xf32>
    %51 = arith.maximumf %49, %50 : vector<8x32xf32>
    %c0_20 = arith.constant 0 : index
    %c0_21 = arith.constant 0 : index
    %52 = vector.load %arg3[%c0_20, %c0_21] : memref<32x32xf32, #tpu.memory_space<vmem>>, vector<32x32xf32>
    %cst_22 = arith.constant dense<0.000000e+00> : vector<8x32xf32>
    %53 = tpu.matmul %51, %52, %cst_22 {dimension_numbers = #tpu.dot_dimension_numbers<[1], [0], [0], [1], [0, 0, 1, 1], [], []>} : vector<8x32xf32>, vector<32x32xf32>, vector<8x32xf32> -> vector<8x32xf32>
    %c0_23 = arith.constant 0 : index
    %c0_24 = arith.constant 0 : index
    %54 = vector.load %arg5[%c0_23, %c0_24] : memref<1x32xf32, #tpu.memory_space<vmem>>, vector<1x32xf32>
    %55 = vector.broadcast %54 : vector<1x32xf32> to vector<8x32xf32>
    %56 = arith.addf %53, %55 : vector<8x32xf32>
    %57 = vector.extract_strided_slice %56 {offsets = [0, 0], sizes = [8, 16], strides = [1, 1]} : vector<8x32xf32> to vector<8x16xf32>
    %58 = vector.extract_strided_slice %56 {offsets = [0, 16], sizes = [8, 16], strides = [1, 1]} : vector<8x32xf32> to vector<8x16xf32>
    %cst_25 = arith.constant 5.000000e-01 : f32
    %59 = vector.broadcast %cst_25 : f32 to vector<8x16xf32>
    %60 = arith.mulf %58, %59 : vector<8x16xf32>
    %61 = math.exp %60 : vector<8x16xf32>
    %c0_26 = arith.constant 0 : index
    %c0_27 = arith.constant 0 : index
    %62 = vector.load %arg6[%c0_26, %c0_27] : memref<8x16xf32, #tpu.memory_space<vmem>>, vector<8x16xf32>
    %63 = arith.mulf %61, %62 : vector<8x16xf32>
    %64 = arith.addf %57, %63 : vector<8x16xf32>
    %65 = tpu.concatenate %56, %64 in 1 : vector<8x32xf32>, vector<8x16xf32> -> vector<8x48xf32>
    %cst_28 = arith.constant 0.000000e+00 : f32
    %66 = vector.broadcast %cst_28 : f32 to vector<8x80xf32>
    %67 = tpu.concatenate %65, %66 in 1 : vector<8x48xf32>, vector<8x80xf32> -> vector<8x128xf32>
    %c0_29 = arith.constant 0 : index
    %c0_30 = arith.constant 0 : index
    %68 = vector.load %arg7[%c0_29, %c0_30] : memref<8x128xf32, #tpu.memory_space<vmem>>, vector<8x128xf32>
    tpu.vector_store %arg7[%c0_29, %c0_30], %67 {strides = array<i32>} : memref<8x128xf32, #tpu.memory_space<vmem>>, vector<8x128xf32>,
    return
  }
}

</mosaic_0001>

<llo_original>
// kernel: projector_forward.1
$region0: #{projector_forward.1}
  #allocation0 [shape = 'u32[]', space=smem, size = 0x4, offset = 0x4, fixed_abs, tag = 'smem constant byte address 0x4 - core index']
  #allocation1 [shape = 'u32[144,128]{1,0:T(1,128)}', space=vmem, size = 0x12000, scoped, tag = 'internal scratch']
  %s0 = inlined_call_operand.hbm [shape: f32[8,32], index: 0, kind: input, shape index: {}]
  %s1 = inlined_call_operand.hbm [shape: f32[32,32], index: 1, kind: input, shape index: {}]
  %s2 = inlined_call_operand.hbm [shape: f32[32,32], index: 2, kind: input, shape index: {}]
  %s3 = inlined_call_operand.hbm [shape: f32[32,32], index: 3, kind: input, shape index: {}]
  %s4 = inlined_call_operand.vmem [shape: f32[4,32], index: 4, kind: input, shape index: {}]
  %s5 = inlined_call_operand.vmem [shape: f32[1,32], index: 5, kind: input, shape index: {}]
  %s6 = inlined_call_operand.vmem [shape: f32[8,16], index: 6, kind: input, shape index: {}]
  %s7 = inlined_call_operand.vmem [shape: f32[8,128], index: 7, kind: output, shape index: {}]
  %s8 = sld [smem:[#allocation0]]
  $region54: #{projector_forward.1} parent=0
    _
  %s10 = ssub.s32 1, %s8
  %s11 = scalar_select 0, %s10, %s8
  $region1: #{projector_forward.1} parent=0
    #allocation2 [shape = 'u8[4096]{0}', space=vmem, size = 0x1000, scoped, tag = 'input window, operand 0, single buffered']
    #allocation3 [shape = 's32[1]{0}', space=sflag, size = 0x4, scoped, tag = 'scoped memory for projector_forward.1']
    #allocation4 [shape = 'u8[16384]{0}', space=vmem, size = 0x4000, scoped, tag = 'input window, operand 1, single buffered']
    #allocation5 [shape = 's32[1]{0}', space=sflag, size = 0x4, scoped, tag = 'scoped memory for projector_forward.1']
    #allocation6 [shape = 'u8[16384]{0}', space=vmem, size = 0x4000, scoped, tag = 'input window, operand 2, single buffered']
    #allocation7 [shape = 'u8[16384]{0}', space=vmem, size = 0x4000, scoped, tag = 'input window, operand 3, single buffered']
    #allocation8 [shape = 's32[1]{0}', space=sflag, size = 0x4, scoped, tag = 'scoped memory for projector_forward.1']
    %12 = vsyncpa [#allocation3], 0
    %13 = vsyncpa [#allocation5], 0
    %14 = vsyncpa [#allocation8], 0
    // Predicated region
    $region2: #{projector_forward.1} parent=1 // pred_check
      _
    $region3: #{projector_forward.1} parent=1 // pred_check_branch
      %16 = sbr.rel (0) target = $region5
    $region4: #{projector_forward.1} parent=1 // pred_region
      %s18 = ssub.s32 128, 128
      %19 = vsyncadd [#allocation3], %s18
      %s21 = sshll.u32 [#allocation2], 4
      %s22 = int_to_ptr.vmem [resolvable:$true] %s21
      %24 = dma.hbm_to_vmem [thread:$0]  %s0, 128, %s22, [#allocation3]
    $region5: #{projector_forward.1} parent=1 // pred_fallthru
      _
    // Predicated region
    $region6: #{projector_forward.1} parent=1 // pred_check
      _
    $region7: #{projector_forward.1} parent=1 // pred_check_branch
      %26 = sbr.rel (0) target = $region9
    $region8: #{projector_forward.1} parent=1 // pred_region
      %s28 = ssub.s32 512, 512
      %29 = vsyncadd [#allocation5], %s28
      %s30 = sshll.u32 [#allocation4], 4
      %s31 = int_to_ptr.vmem [resolvable:$true] %s30
      %36 = dma.hbm_to_vmem [thread:$0]  %s1, 512, %s31, [#allocation5], 128, 128, 8
    $region9: #{projector_forward.1} parent=1 // pred_fallthru
      _
    // Predicated region
    $region10: #{projector_forward.1} parent=1 // pred_check
      _
    $region11: #{projector_forward.1} parent=1 // pred_check_branch
      %38 = sbr.rel (0) target = $region13
    $region12: #{projector_forward.1} parent=1 // pred_region
      %s40 = ssub.s32 512, 512
      %41 = vsyncadd [#allocation5], %s40
      %s42 = sshll.u32 [#allocation6], 4
      %s43 = int_to_ptr.vmem [resolvable:$true] %s42
      %48 = dma.hbm_to_vmem [thread:$0]  %s2, 512, %s43, [#allocation5], 128, 128, 8
    $region13: #{projector_forward.1} parent=1 // pred_fallthru
      _
    // Predicated region
    $region14: #{projector_forward.1} parent=1 // pred_check
      _
    $region15: #{projector_forward.1} parent=1 // pred_check_branch
      %50 = sbr.rel (0) target = $region17
    $region16: #{projector_forward.1} parent=1 // pred_region
      %s52 = ssub.s32 512, 512
      %53 = vsyncadd [#allocation8], %s52
      %s54 = sshll.u32 [#allocation7], 4
      %s55 = int_to_ptr.vmem [resolvable:$true] %s54
      %60 = dma.hbm_to_vmem [thread:$0]  %s3, 512, %s55, [#allocation8], 128, 128, 8
    $region17: #{projector_forward.1} parent=1 // pred_fallthru
      _
    // Predicated region
    $region18: #{projector_forward.1} parent=1 // pred_check
      _
    $region19: #{projector_forward.1} parent=1 // pred_check_branch
      %62 = sbr.rel (0) target = $region21
    $region20: #{projector_forward.1} parent=1 // pred_region
      _
    $region21: #{projector_forward.1} parent=1 // pred_fallthru
      _
    // Predicated region
    $region22: #{projector_forward.1} parent=1 // pred_check
      _
    $region23: #{projector_forward.1} parent=1 // pred_check_branch
      %64 = sbr.rel (0) target = $region25
    $region24: #{projector_forward.1} parent=1 // pred_region
      _
    $region25: #{projector_forward.1} parent=1 // pred_fallthru
      _
    // Predicated region
    $region26: #{projector_forward.1} parent=1 // pred_check
      _
    $region27: #{projector_forward.1} parent=1 // pred_check_branch
      %66 = sbr.rel (0) target = $region29
    $region28: #{projector_forward.1} parent=1 // pred_region
      _
    $region29: #{projector_forward.1} parent=1 // pred_fallthru
      _
    // Predicated region
    $region30: #{projector_forward.1} parent=1 // pred_check
      _
    $region31: #{projector_forward.1} parent=1 // pred_check_branch
      %68 = sbr.rel (0) target = $region33
    $region32: #{projector_forward.1} parent=1 // pred_region
      %69 = dma.done [#allocation3], 128
    $region33: #{projector_forward.1} parent=1 // pred_fallthru
      _
    // Predicated region
    $region34: #{projector_forward.1} parent=1 // pred_check
      _
    $region35: #{projector_forward.1} parent=1 // pred_check_branch
      %71 = sbr.rel (0) target = $region37
    $region36: #{projector_forward.1} parent=1 // pred_region
      %72 = dma.done [#allocation5], 512
    $region37: #{projector_forward.1} parent=1 // pred_fallthru
      _
    // Predicated region
    $region38: #{projector_forward.1} parent=1 // pred_check
      _
    $region39: #{projector_forward.1} parent=1 // pred_check_branch
      %74 = sbr.rel (0) target = $region41
    $region40: #{projector_forward.1} parent=1 // pred_region
      %75 = dma.done [#allocation5], 512
    $region41: #{projector_forward.1} parent=1 // pred_fallthru
      _
    // Predicated region
    $region42: #{projector_forward.1} parent=1 // pred_check
      _
    $region43: #{projector_forward.1} parent=1 // pred_check_branch
      %77 = sbr.rel (0) target = $region45
    $region44: #{projector_forward.1} parent=1 // pred_region
      %78 = dma.done [#allocation8], 512
    $region45: #{projector_forward.1} parent=1 // pred_fallthru
      _
    %v79 = vld [vmem:[#allocation2] sm:$0xff]
    %v80 = vld [vmem:[%s4] sm:$0xf]
    %v81 = vld [vmem:[#allocation4] sm:$0xff]
    %v82 = vld [vmem:[#allocation4 + $0x8] sm:$0xff]
    %v83 = vld [vmem:[#allocation4 + $0x10] sm:$0xff]
    %v84 = vld [vmem:[#allocation4 + $0x18] sm:$0xff]
    %vm85 = vcmask 261120
    %v87 = vsel %vm85, %v79, 0
    %89 = vmatprep.subr.mxu0 0.0
    %90 = vmatpush1.msra.mxu0 %v81
    %91 = vmatprep.subr.mxu0 0.0
    %92 = vmatpush1.msra.mxu0 %v82
    %93 = vmatprep.subr.mxu0 0.0
    %94 = vmatpush1.msra.mxu0 %v83
    %95 = vmatprep.subr.mxu0 0.0
    %96 = vmatpush1.msra.mxu0 %v84
    %97 = vmatprep.subr.mxu0 0.0
    %98 = vmatpush1.msra.mxu0 0.0
    %99 = vmatprep.subr.mxu0 0.0
    %100 = vmatpush1.msra.mxu0 0.0
    %101 = vmatprep.subr.mxu0 0.0
    %102 = vmatpush1.msra.mxu0 0.0
    %103 = vmatprep.subr.mxu0 0.0
    %104 = vmatpush1.msra.mxu0 0.0
    %105 = vmatprep.subr.mxu0 0.0
    %106 = vmatpush1.msra.mxu0 0.0
    %107 = vmatprep.subr.mxu0 0.0
    %108 = vmatpush1.msra.mxu0 0.0
    %109 = vmatprep.subr.mxu0 0.0
    %110 = vmatpush1.msra.mxu0 0.0
    %111 = vmatprep.subr.mxu0 0.0
    %112 = vmatpush1.msra.mxu0 0.0
    %113 = vmatprep.subr.mxu0 0.0
    %114 = vmatpush1.msra.mxu0 0.0
    %115 = vmatprep.subr.mxu0 0.0
    %116 = vmatpush1.msra.mxu0 0.0
    %117 = vmatprep.subr.mxu0 0.0
    %118 = vmatpush1.msra.mxu0 0.0
    %119 = vmatprep.subr.mxu0 0.0
    %120 = vmatpush1.msra.mxu0 0.0
    %121 = vmatprep.subr.mxu0 0.0
    %122 = vmatpush1.msra.mxu0 0.0
    %123 = vmatprep.subr.mxu0 0.0
    %124 = vmatpush1.msra.mxu0 0.0
    %125 = vmatprep.subr.mxu0 0.0
    %126 = vmatpush1.msra.mxu0 0.0
    %127 = vmatprep.subr.mxu0 0.0
    %128 = vmatpush1.msra.mxu0 0.0
    %129 = vmatprep.subr.mxu0 0.0
    %130 = vmatpush1.msra.mxu0 0.0
    %131 = vmatprep.subr.mxu0 0.0
    %132 = vmatpush1.msra.mxu0 0.0
    %133 = vmatprep.subr.mxu0 0.0
    %134 = vmatpush1.msra.mxu0 0.0
    %135 = vmatprep.subr.mxu0 0.0
    %136 = vmatpush1.msra.mxu0 0.0
    %137 = vmatprep.subr.mxu0 0.0
    %138 = vmatpush1.msra.mxu0 0.0
    %139 = vmatprep.subr.mxu0 0.0
    %140 = vmatpush1.msra.mxu0 0.0
    %141 = vmatprep.subr.mxu0 0.0
    %142 = vmatpush1.msra.mxu0 0.0
    %143 = vmatprep.subr.mxu0 0.0
    %144 = vmatpush1.msra.mxu0 0.0
    %145 = vmatprep.subr.mxu0 0.0
    %146 = vmatpush1.msra.mxu0 0.0
    %147 = vmatprep.subr.mxu0 0.0
    %148 = vmatpush1.msra.mxu0 0.0
    %149 = vmatprep.subr.mxu0 0.0
    %150 = vmatpush1.msra.mxu0 0.0
    %151 = vmatprep.subr.mxu0 0.0
    %152 = vmatpush1.msra.mxu0 0.0
    %153 = vmatprep.mubr.f32.mxu0 0.0
    %154 = vmatmul.mubr.f32.gmra.mrb[0].mxu0 %v87
    %v155 = vpop.f32.mrb[0].mxu0
    %v156 = vadd.f32 0.0, %v155
    %v157 = vpop.f32.mrb[0].mxu0
    %158 = vdwg.mxu0
    %v159 = vsel %vm85, %v156, 0.0
    %v160 = vrot.slane %v159, 4
    %v161 = vadd.f32 %v159, %v160
    %v162 = vrot.slane %v161, 2
    %v163 = vadd.f32 %v161, %v162
    %v164 = vrot.slane %v163, 1
    %v165 = vadd.f32 %v163, %v164
    %v166 = vmul.f32 %v165, 0.125
    %v167 = vsub.f32 %v156, %v166
    %v168 = vmul.f32 %v167, %v167
    %v169 = vsel %vm85, %v168, 0.0
    %v170 = vrot.slane %v169, 4
    %v171 = vadd.f32 %v169, %v170
    %v172 = vrot.slane %v171, 2
    %v173 = vadd.f32 %v171, %v172
    %v174 = vrot.slane %v173, 1
    %v175 = vadd.f32 %v173, %v174
    %v176 = vmul.f32 %v175, 0.125
    %v177 = vadd.f32 %v176, 1e-05
    %v178 = vrsqrt.pop %v177
    %v179 = vmul.f32 %v80, %v178
    %v180 = vlaneseq
    %v181 = vshrl.u32 %v180, 7
    %v182 = vsub.s32 0, %v181
    %v183 = vrot.slane %v179, %v182
    %v184 = vmul.f32 %v167, %v183
    %v185 = vlaneseq
    %v186 = vshrl.u32 %v185, 7
    %v187 = vsub.s32 1, %v186
    %v188 = vrot.slane %v80, %v187
    %v189 = vadd.f32 %v184, %v188
    %v190 = vmax.f32 %v189, 0.0
    %v191 = vld [vmem:[#allocation6] sm:$0xff]
    %v192 = vld [vmem:[#allocation6 + $0x8] sm:$0xff]
    %v193 = vld [vmem:[#allocation6 + $0x10] sm:$0xff]
    %v194 = vld [vmem:[#allocation6 + $0x18] sm:$0xff]
    %v196 = vsel %vm85, %v190, 0
    %198 = vmatprep.subr.mxu0 0.0
    %199 = vmatpush1.msra.mxu0 %v191
    %200 = vmatprep.subr.mxu0 0.0
    %201 = vmatpush1.msra.mxu0 %v192
    %202 = vmatprep.subr.mxu0 0.0
    %203 = vmatpush1.msra.mxu0 %v193
    %204 = vmatprep.subr.mxu0 0.0
    %205 = vmatpush1.msra.mxu0 %v194
    %206 = vmatprep.subr.mxu0 0.0
    %207 = vmatpush1.msra.mxu0 0.0
    %208 = vmatprep.subr.mxu0 0.0
    %209 = vmatpush1.msra.mxu0 0.0
    %210 = vmatprep.subr.mxu0 0.0
    %211 = vmatpush1.msra.mxu0 0.0
    %212 = vmatprep.subr.mxu0 0.0
    %213 = vmatpush1.msra.mxu0 0.0
    %214 = vmatprep.subr.mxu0 0.0
    %215 = vmatpush1.msra.mxu0 0.0
    %216 = vmatprep.subr.mxu0 0.0
    %217 = vmatpush1.msra.mxu0 0.0
    %218 = vmatprep.subr.mxu0 0.0
    %219 = vmatpush1.msra.mxu0 0.0
    %220 = vmatprep.subr.mxu0 0.0
    %221 = vmatpush1.msra.mxu0 0.0
    %222 = vmatprep.subr.mxu0 0.0
    %223 = vmatpush1.msra.mxu0 0.0
    %224 = vmatprep.subr.mxu0 0.0
    %225 = vmatpush1.msra.mxu0 0.0
    %226 = vmatprep.subr.mxu0 0.0
    %227 = vmatpush1.msra.mxu0 0.0
    %228 = vmatprep.subr.mxu0 0.0
    %229 = vmatpush1.msra.mxu0 0.0
    %230 = vmatprep.subr.mxu0 0.0
    %231 = vmatpush1.msra.mxu0 0.0
    %232 = vmatprep.subr.mxu0 0.0
    %233 = vmatpush1.msra.mxu0 0.0
    %234 = vmatprep.subr.mxu0 0.0
    %235 = vmatpush1.msra.mxu0 0.0
    %236 = vmatprep.subr.mxu0 0.0
    %237 = vmatpush1.msra.mxu0 0.0
    %238 = vmatprep.subr.mxu0 0.0
    %239 = vmatpush1.msra.mxu0 0.0
    %240 = vmatprep.subr.mxu0 0.0
    %241 = vmatpush1.msra.mxu0 0.0
    %242 = vmatprep.subr.mxu0 0.0
    %243 = vmatpush1.msra.mxu0 0.0
    %244 = vmatprep.subr.mxu0 0.0
    %245 = vmatpush1.msra.mxu0 0.0
    %246 = vmatprep.subr.mxu0 0.0
    %247 = vmatpush1.msra.mxu0 0.0
    %248 = vmatprep.subr.mxu0 0.0
    %249 = vmatpush1.msra.mxu0 0.0
    %250 = vmatprep.subr.mxu0 0.0
    %251 = vmatpush1.msra.mxu0 0.0
    %252 = vmatprep.subr.mxu0 0.0
    %253 = vmatpush1.msra.mxu0 0.0
    %254 = vmatprep.subr.mxu0 0.0
    %255 = vmatpush1.msra.mxu0 0.0
    %256 = vmatprep.subr.mxu0 0.0
    %257 = vmatpush1.msra.mxu0 0.0
    %258 = vmatprep.subr.mxu0 0.0
    %259 = vmatpush1.msra.mxu0 0.0
    %260 = vmatprep.subr.mxu0 0.0
    %261 = vmatpush1.msra.mxu0 0.0
    %262 = vmatprep.mubr.f32.mxu0 0.0
    %263 = vmatmul.mubr.f32.gmra.mrb[0].mxu0 %v196
    %v264 = vpop.f32.mrb[0].mxu0
    %v265 = vadd.f32 0.0, %v264
    %v266 = vpop.f32.mrb[0].mxu0
    %267 = vdwg.mxu0
    %v268 = vsel %vm85, %v265, 0.0
    %v269 = vrot.slane %v268, 4
    %v270 = vadd.f32 %v268, %v269
    %v271 = vrot.slane %v270, 2
    %v272 = vadd.f32 %v270, %v271
    %v273 = vrot.slane %v272, 1
    %v274 = vadd.f32 %v272, %v273
    %v275 = vmul.f32 %v274, 0.125
    %v276 = vsub.f32 %v265, %v275
    %v277 = vmul.f32 %v276, %v276
    %v278 = vsel %vm85, %v277, 0.0
    %v279 = vrot.slane %v278, 4
    %v280 = vadd.f32 %v278, %v279
    %v281 = vrot.slane %v280, 2
    %v282 = vadd.f32 %v280, %v281
    %v283 = vrot.slane %v282, 1
    %v284 = vadd.f32 %v282, %v283
    %v285 = vmul.f32 %v284, 0.125
    %v286 = vadd.f32 %v285, 1e-05
    %v287 = vrsqrt.pop %v286
    %v288 = vmul.f32 %v80, %v287
    %v289 = vlaneseq
    %v290 = vshrl.u32 %v289, 7
    %v291 = vsub.s32 2, %v290
    %v292 = vrot.slane %v288, %v291
    %v293 = vmul.f32 %v276, %v292
    %v294 = vlaneseq
    %v295 = vshrl.u32 %v294, 7
    %v296 = vsub.s32 3, %v295
    %v297 = vrot.slane %v80, %v296
    %v298 = vadd.f32 %v293, %v297
    %v299 = vmax.f32 %v298, 0.0
    %v300 = vld [vmem:[#allocation7] sm:$0xff]
    %v301 = vld [vmem:[#allocation7 + $0x8] sm:$0xff]
    %v302 = vld [vmem:[#allocation7 + $0x10] sm:$0xff]
    %v303 = vld [vmem:[#allocation7 + $0x18] sm:$0xff]
    %v304 = vld [vmem:[%s5] sm:$0x1]
    %v306 = vlaneseq
    %v307 = vshrl.u32 %v306, 7
    %v308 = vsub.s32 0, %v307
    %v309 = vrot.slane %v304, %v308
    %v312 = vsel %vm85, %v299, 0
    %314 = vmatprep.subr.mxu0 0.0
    %315 = vmatpush1.msra.mxu0 %v300
    %316 = vmatprep.subr.mxu0 0.0
    %317 = vmatpush1.msra.mxu0 %v301
    %318 = vmatprep.subr.mxu0 0.0
    %319 = vmatpush1.msra.mxu0 %v302
    %320 = vmatprep.subr.mxu0 0.0
    %321 = vmatpush1.msra.mxu0 %v303
    %322 = vmatprep.subr.mxu0 0.0
    %323 = vmatpush1.msra.mxu0 0.0
    %324 = vmatprep.subr.mxu0 0.0
    %325 = vmatpush1.msra.mxu0 0.0
    %326 = vmatprep.subr.mxu0 0.0
    %327 = vmatpush1.msra.mxu0 0.0
    %328 = vmatprep.subr.mxu0 0.0
    %329 = vmatpush1.msra.mxu0 0.0
    %330 = vmatprep.subr.mxu0 0.0
    %331 = vmatpush1.msra.mxu0 0.0
    %332 = vmatprep.subr.mxu0 0.0
    %333 = vmatpush1.msra.mxu0 0.0
    %334 = vmatprep.subr.mxu0 0.0
    %335 = vmatpush1.msra.mxu0 0.0
    %336 = vmatprep.subr.mxu0 0.0
    %337 = vmatpush1.msra.mxu0 0.0
    %338 = vmatprep.subr.mxu0 0.0
    %339 = vmatpush1.msra.mxu0 0.0
    %340 = vmatprep.subr.mxu0 0.0
    %341 = vmatpush1.msra.mxu0 0.0
    %342 = vmatprep.subr.mxu0 0.0
    %343 = vmatpush1.msra.mxu0 0.0
    %344 = vmatprep.subr.mxu0 0.0
    %345 = vmatpush1.msra.mxu0 0.0
    %346 = vmatprep.subr.mxu0 0.0
    %347 = vmatpush1.msra.mxu0 0.0
    %348 = vmatprep.subr.mxu0 0.0
    %349 = vmatpush1.msra.mxu0 0.0
    %350 = vmatprep.subr.mxu0 0.0
    %351 = vmatpush1.msra.mxu0 0.0
    %352 = vmatprep.subr.mxu0 0.0
    %353 = vmatpush1.msra.mxu0 0.0
    %354 = vmatprep.subr.mxu0 0.0
    %355 = vmatpush1.msra.mxu0 0.0
    %356 = vmatprep.subr.mxu0 0.0
    %357 = vmatpush1.msra.mxu0 0.0
    %358 = vmatprep.subr.mxu0 0.0
    %359 = vmatpush1.msra.mxu0 0.0
    %360 = vmatprep.subr.mxu0 0.0
    %361 = vmatpush1.msra.mxu0 0.0
    %362 = vmatprep.subr.mxu0 0.0
    %363 = vmatpush1.msra.mxu0 0.0
    %364 = vmatprep.subr.mxu0 0.0
    %365 = vmatpush1.msra.mxu0 0.0
    %366 = vmatprep.subr.mxu0 0.0
    %367 = vmatpush1.msra.mxu0 0.0
    %368 = vmatprep.subr.mxu0 0.0
    %369 = vmatpush1.msra.mxu0 0.0
    %370 = vmatprep.subr.mxu0 0.0
    %371 = vmatpush1.msra.mxu0 0.0
    %372 = vmatprep.subr.mxu0 0.0
    %373 = vmatpush1.msra.mxu0 0.0
    %374 = vmatprep.subr.mxu0 0.0
    %375 = vmatpush1.msra.mxu0 0.0
    %376 = vmatprep.subr.mxu0 0.0
    %377 = vmatpush1.msra.mxu0 0.0
    %378 = vmatprep.mubr.f32.mxu0 0.0
    %379 = vmatmul.mubr.f32.gmra.mrb[0].mxu0 %v312
    %v380 = vpop.f32.mrb[0].mxu0
    %v381 = vadd.f32 %v309, %v380
    %v382 = vpop.f32.mrb[0].mxu0
    %383 = vdwg.mxu0
    %v384 = vmul.f32 %v381, 0.5
    %v385 = vmul.f32 %v384, 1.442695
    %v386 = vpow.pop %v385
    %v387 = vld [vmem:[%s6] sm:$0xff]
    %389 = vrot.lane.b32.xlu0 %v387, 16
    %v390 = vpop.permute.xlu0 %389
    %v392 = vmul.f32 %v386, %v390
    %394 = vrot.lane.b32.xlu0 %v392, 112
    %v395 = vpop.permute.xlu0 %394
    %v397 = vadd.f32 %v381, %v395
    %399 = vrot.lane.b32.xlu0 %v397, 32
    %v400 = vpop.permute.xlu0 %399
    %v402 = vsel %vm85, %v381, %v400
    %vm403 = vcmask 392192
    %v404 = vsel %vm403, %v402, 0.0
    %405 = vst [vmem:[%s7] sm:$0xff] %v404
    // Predicated region
    $region46: #{projector_forward.1} parent=1 // pred_check
      _
    $region47: #{projector_forward.1} parent=1 // pred_check_branch
      %407 = sbr.rel (0) target = $region49
    $region48: #{projector_forward.1} parent=1 // pred_region
      _
    $region49: #{projector_forward.1} parent=1 // pred_fallthru
      _
    // Predicated region
    $region50: #{projector_forward.1} parent=1 // pred_check
      _
    $region51: #{projector_forward.1} parent=1 // pred_check_branch
      %409 = sbr.rel (0) target = $region53
    $region52: #{projector_forward.1} parent=1 // pred_region
      _
    $region53: #{projector_forward.1} parent=1 // pred_fallthru
      _
    %410 = vsyncpa [#allocation3], 1
    %411 = vsyncpa [#allocation5], 1
    %412 = vsyncpa [#allocation8], 1

</llo_original>
